<compile_context>
chip_gen: v7x
topology: tpu7x:2x2x1
jax: 0.10.0
libtpu: 0.0.40
codegen_flags: <defaults>
</compile_context>

<pallas_src>
import jax
import jax.numpy as jnp
from jax import lax
from jax.experimental import pallas as pl
from jax.experimental.pallas import tpu as pltpu

EPS = 1e-6


def _round_up(x, m):
    return ((x + m - 1) // m) * m


def _is_multi_core_tpu():
    """True only for chips with >1 TensorCore (v7x); used to gate CORE_PARALLEL."""
    try:
        dev = jax.devices()[0]
        kind = str(getattr(dev, "device_kind", "")).lower()
        if "v7" in kind:
            return True
        return int(getattr(dev, "num_cores", 1) or 1) > 1
    except Exception:
        return False


def _vmem_budget_bytes(block_n, d2, D, O):
    """Explicit per-block VMEM budget (double-buffered I/O + live f32 temps + weights)."""
    io = 2 * 4 * (1 + O) * block_n                 # 2x buffered x(1,bn) + out(O,bn)
    temps = 4 * (d2 + 4 * D + 2) * block_n         # pos + a few (D,bn) temps + (1,bn) stats
    weights = 2 * 4 * (2 * d2 + d2 * D + D + 3 * (D * D + D) + D * O + O)
    budget = io + temps + weights + (4 << 20)      # + headroom
    # clamp: never below the 32 MiB scoped default, never above what v7x can take
    return int(min(max(budget, 32 << 20), 48 << 20))


def _dpb_kernel(x_ref, trig_ref, wp_ref, bp_ref, ws_ref, bs_ref,
                wo_ref, bo_ref, o_ref):
    D = wp_ref.shape[0]                 # pos_dim = 32
    inv_d = 1.0 / D

    # transform + pos_proj, fused (lane-dense: columns = samples):
    #   sublanes 0..l-1  : phase 0    -> sin(x*freq)
    #   sublanes l..2l-1 : phase pi/2 -> cos(x*freq)   (sin(z+pi/2) == cos(z))
    # One EUP sin over 2l sublanes and ONE K=2l matmul.
    trig = trig_ref[...]                                   # (2l, 2): col0=freq, col1=phase
    pos = jnp.sin(trig[:, 0:1] * x_ref[...] + trig[:, 1:2])  # (2l, bn)
    h = jnp.dot(wp_ref[...], pos,
                preferred_element_type=jnp.float32) + bp_ref[...]   # (D, bn)

    def norm_relu(v):
        # ReLU(SimpleRMSNorm(v)) with a single EUP op:
        #   v / (||v|| * d^{-1/2} + eps)  ~=  v * rsqrt(||v||^2 / d + eps^2)
        # (eps folded under the sqrt; relative deviation ~1e-6 for |v| = O(1)).
        ss = jnp.sum(v * v, axis=0, keepdims=True)          # (1, bn), sublane reduce (XLU)
        inv = lax.rsqrt(ss * inv_d + EPS * EPS)
        return jnp.maximum(v * inv, 0.0)

    # residual MLP blocks (residual=True); static unroll over the weight stack.
    for i in range(ws_ref.shape[0]):
        u = norm_relu(h)
        h = jnp.dot(ws_ref[i], u,
                    preferred_element_type=jnp.float32) + bs_ref[i] + h

    # output head
    u = norm_relu(h)
    o_ref[...] = (jnp.dot(wo_ref[...], u, preferred_element_type=jnp.float32)
                  + bo_ref[...]).astype(o_ref.dtype)


def dynamic_pos_bias_v9(x, params, *, block_n=None, block_cap=32768):
    """x: (N, 1) float32 positions. Returns (N, outdim) float32."""
    N = x.shape[0]
    d2 = params["trig"].shape[0]          # 2*l
    D = params["wp"].shape[0]             # pos_dim
    O = params["wo"].shape[0]             # outdim

    x_t = x.reshape(1, N)                 # lane-dense input slab

    multi_core = _is_multi_core_tpu()
    if block_n is None:
        if multi_core:
            # keep >= 2 grid steps so CORE_PARALLEL can shard both TensorCores
            block_n = min(_round_up(pl.cdiv(N, 2), 128), block_cap)
        else:
            # 1 TC: grid is a serial loop -> a single big block kills per-step overhead
            block_n = min(_round_up(N, 128), block_cap)
    block_n = max(128, min(_round_up(block_n, 128), block_cap))

    grid = (pl.cdiv(N, block_n),)
    vmem_limit = _vmem_budget_bytes(block_n, d2, D, O)

    def full_spec(shape):
        nd = len(shape)
        return pl.BlockSpec(shape, lambda i, _nd=nd: (0,) * _nd)

    in_specs = [
        pl.BlockSpec((1, block_n), lambda i: (0, i)),   # x   (1, N)   lane-dense
        full_spec((d2, 2)),                             # trig: col0=freq, col1=phase
        full_spec((D, d2)),                             # wp  (out, in) = PyTorch layout
        full_spec((D, 1)),                              # bp
        full_spec((3, D, D)),                           # w_stack (3 residual layers)
        full_spec((3, D, 1)),                           # b_stack
        full_spec((O, D)),                              # wo (head)
        full_spec((O, 1)),                              # bo
    ]
    out_specs = pl.BlockSpec((O, block_n), lambda i: (0, i))   # (O, N) lane-dense stores

    def _call(dim_sems):
        return pl.pallas_call(
            _dpb_kernel,
            out_shape=jax.ShapeDtypeStruct((O, N), jnp.float32),
            grid_spec=pltpu.PrefetchScalarGridSpec(
                num_scalar_prefetch=0,
                grid=grid,
                in_specs=in_specs,
                out_specs=out_specs,
            ),
            compiler_params=pltpu.CompilerParams(
                dimension_semantics=dim_sems,
                vmem_limit_bytes=vmem_limit),
        )(x_t, params["trig"], params["wp"], params["bp"],
          params["w_stack"], params["b_stack"], params["wo"], params["bo"])

    if multi_core:
        try:
            out_t = jax.block_until_ready(_call((pltpu.CORE_PARALLEL,)))
        except Exception:
            # conservative fallback if core-parallel lowering is rejected
            out_t = _call(("parallel",))
    else:
        out_t = _call(("parallel",))

    return out_t.T                         # back to module's (N, outdim) layout


def make_params(key, *, pos_dim=32, outdim=8, l=4, layers=3):
    """Deterministic synthetic parameters matching the module's __init__ shapes.

    Weights are stored in PyTorch nn.Linear orientation (out_features, in_features),
    biases as column vectors (out_features, 1), which is exactly the layout the
    transposed (features-on-sublanes) kernel wants.
    """
    d = 2 * l
    keys = jax.random.split(key, layers + 2)

    # transform_type == 1 frequency table (non-trainable buffer), shape (1, l)
    freq = (1.0 / 10000.0 ** (jnp.arange(0, d, 2, dtype=jnp.float32) / d)
            ).reshape(1, l)
    # packed column layout for the fused sin/cos trick:
    #   trig[:, 0] = [freq | freq],  trig[:, 1] = [0 | pi/2]
    freq_col = jnp.concatenate([freq, freq], axis=-1).reshape(d, 1)
    phase_col = jnp.concatenate(
        [jnp.zeros((1, l), jnp.float32),
         jnp.full((1, l), jnp.pi / 2, jnp.float32)], axis=-1).reshape(d, 1)
    trig = jnp.concatenate([freq_col, phase_col], axis=-1)        # (d, 2)

    def lin(k, fan_in, fan_out):
        w = jax.random.normal(k, (fan_out, fan_in), jnp.float32) * 0.02
        b = jnp.zeros((fan_out, 1), jnp.float32) + 0.01
        return w, b

    wp, bp = lin(keys[0], d, pos_dim)
    ws, bs = [], []
    for i in range(layers):
        w, b = lin(keys[1 + i], pos_dim, pos_dim)
        ws.append(w)
        bs.append(b)
    wo, bo = lin(keys[layers + 1], pos_dim, outdim)

    return dict(freq=freq, trig=trig, wp=wp, bp=bp,
                w_stack=jnp.stack(ws), b_stack=jnp.stack(bs),
                wo=wo, bo=bo)


def reference_forward(x, p):
    """Pure-JAX reference matching the PyTorch module exactly (true cos, exact RMS)."""
    D = p["wp"].shape[0]
    xf = x * p["freq"]                                       # (N, l)
    pos = jnp.concatenate([jnp.sin(xf), jnp.cos(xf)], axis=-1)
    h = pos @ p["wp"].T + p["bp"].T

    def rms(v):
        nrm = jnp.linalg.norm(v, axis=-1, keepdims=True)
        return v / (nrm * D ** -0.5 + EPS)

    for i in range(p["w_stack"].shape[0]):
        h = jnp.maximum(rms(h), 0.0) @ p["w_stack"][i].T + p["b_stack"][i].T + h
    return jnp.maximum(rms(h), 0.0) @ p["wo"].T + p["bo"].T


if __name__ == "__main__":
    key = jax.random.PRNGKey(0)
    k_x, k_p = jax.random.split(key)

    N, POS_DIM, OUTDIM, L = 256, 32, 8, 4
    # scalar relative positions, e.g. values in [-64, 64]
    x = (jax.random.uniform(k_x, (N, 1), jnp.float32) * 2.0 - 1.0) * 64.0
    params = make_params(k_p, pos_dim=POS_DIM, outdim=OUTDIM, l=L)

    out = jax.block_until_ready(dynamic_pos_bias_v9(x, params))
    ref = reference_forward(x, params)
    assert out.shape == (N, OUTDIM)
    # tolerance covers eps-folded rsqrt RMS norm (4x) + f32 pi/2 phase trick
    assert float(jnp.max(jnp.abs(out - ref))) < 2e-3

    # partial / non-multiple-of-128 tile check (padded lanes are cropped on store)
    N2 = 77
    x2 = (jax.random.uniform(jax.random.PRNGKey(1), (N2, 1), jnp.float32)
          * 2.0 - 1.0) * 64.0
    out2 = jax.block_until_ready(dynamic_pos_bias_v9(x2, params))
    ref2 = reference_forward(x2, params)
    assert out2.shape == (N2, OUTDIM)
    assert float(jnp.max(jnp.abs(out2 - ref2))) < 2e-3

    print("KERNEL_OK")
</pallas_src>

<mosaic_0001>
module attributes {stable_mosaic.version = 11 : i64} {
  func.func @_dpb_kernel(%arg0: i32, %arg1: memref<1x256xf32, #tpu.memory_space<vmem>>, %arg2: memref<8x2xf32, #tpu.memory_space<vmem>>, %arg3: memref<32x8xf32, #tpu.memory_space<vmem>>, %arg4: memref<32x1xf32, #tpu.memory_space<vmem>>, %arg5: memref<3x32x32xf32, #tpu.memory_space<vmem>>, %arg6: memref<3x32x1xf32, #tpu.memory_space<vmem>>, %arg7: memref<8x32xf32, #tpu.memory_space<vmem>>, %arg8: memref<8x1xf32, #tpu.memory_space<vmem>>, %arg9: memref<8x256xf32, #tpu.memory_space<vmem>>) attributes {dimension_semantics = [#tpu.dimension_semantics<parallel>], iteration_bounds = array<i64: 1>, scalar_prefetch = 0 : i64, scratch_operands = 0 : i64, tpu.core_type = #tpu.core_type<tc>, window_params = [{transform_indices = @transform_0, window_bounds = array<i64: 1, 256>}, {pipeline_mode = #tpu.pipeline_mode<synchronous>, transform_indices = @transform_1, window_bounds = array<i64: 8, 2>}, {pipeline_mode = #tpu.pipeline_mode<synchronous>, transform_indices = @transform_2, window_bounds = array<i64: 32, 8>}, {pipeline_mode = #tpu.pipeline_mode<synchronous>, transform_indices = @transform_3, window_bounds = array<i64: 32, 1>}, {pipeline_mode = #tpu.pipeline_mode<synchronous>, transform_indices = @transform_4, window_bounds = array<i64: 3, 32, 32>}, {pipeline_mode = #tpu.pipeline_mode<synchronous>, transform_indices = @transform_5, window_bounds = array<i64: 3, 32, 1>}, {pipeline_mode = #tpu.pipeline_mode<synchronous>, transform_indices = @transform_6, window_bounds = array<i64: 8, 32>}, {pipeline_mode = #tpu.pipeline_mode<synchronous>, transform_indices = @transform_7, window_bounds = array<i64: 8, 1>}, {transform_indices = @transform_8, window_bounds = array<i64: 8, 256>}]} {
    %c0 = arith.constant 0 : index
    %c0_0 = arith.constant 0 : index
    %0 = vector.load %arg2[%c0, %c0_0] : memref<8x2xf32, #tpu.memory_space<vmem>>, vector<8x2xf32>
    %1 = vector.extract_strided_slice %0 {offsets = [0, 0], sizes = [8, 1], strides = [1, 1]} : vector<8x2xf32> to vector<8x1xf32>
    %c0_1 = arith.constant 0 : index
    %c0_2 = arith.constant 0 : index
    %2 = vector.load %arg1[%c0_1, %c0_2] : memref<1x256xf32, #tpu.memory_space<vmem>>, vector<1x256xf32>
    %3 = vector.broadcast %1 : vector<8x1xf32> to vector<8x256xf32>
    %4 = vector.broadcast %2 : vector<1x256xf32> to vector<8x256xf32>
    %5 = arith.mulf %3, %4 : vector<8x256xf32>
    %6 = vector.extract_strided_slice %0 {offsets = [0, 1], sizes = [8, 1], strides = [1, 1]} : vector<8x2xf32> to vector<8x1xf32>
    %7 = vector.broadcast %6 : vector<8x1xf32> to vector<8x256xf32>
    %8 = arith.addf %5, %7 : vector<8x256xf32>
    %9 = math.sin %8 : vector<8x256xf32>
    %c0_3 = arith.constant 0 : index
    %c0_4 = arith.constant 0 : index
    %10 = vector.load %arg3[%c0_3, %c0_4] : memref<32x8xf32, #tpu.memory_space<vmem>>, vector<32x8xf32>
    %cst = arith.constant dense<0.000000e+00> : vector<32x256xf32>
    %11 = tpu.matmul %10, %9, %cst {dimension_numbers = #tpu.dot_dimension_numbers<[1], [0], [0], [1], [0, 0, 1, 1], [], []>} : vector<32x8xf32>, vector<8x256xf32>, vector<32x256xf32> -> vector<32x256xf32>
    %c0_5 = arith.constant 0 : index
    %c0_6 = arith.constant 0 : index
    %12 = vector.load %arg4[%c0_5, %c0_6] : memref<32x1xf32, #tpu.memory_space<vmem>>, vector<32x1xf32>
    %13 = vector.broadcast %12 : vector<32x1xf32> to vector<32x256xf32>
    %14 = arith.addf %11, %13 : vector<32x256xf32>
    %15 = arith.mulf %14, %14 : vector<32x256xf32>
    %cst_7 = arith.constant dense<0.000000e+00> : vector<256xf32>
    %16 = vector.multi_reduction <add>, %15, %cst_7 [0] : vector<32x256xf32> to vector<256xf32>
    %17 = vector.shape_cast %16 : vector<256xf32> to vector<1x256xf32>
    %cst_8 = arith.constant 3.125000e-02 : f32
    %18 = vector.broadcast %cst_8 : f32 to vector<1x256xf32>
    %19 = arith.mulf %17, %18 : vector<1x256xf32>
    %cst_9 = arith.constant 9.99999996E-13 : f32
    %20 = vector.broadcast %cst_9 : f32 to vector<1x256xf32>
    %21 = arith.addf %19, %20 : vector<1x256xf32>
    %22 = math.rsqrt %21 : vector<1x256xf32>
    %23 = vector.broadcast %22 : vector<1x256xf32> to vector<32x256xf32>
    %24 = arith.mulf %14, %23 : vector<32x256xf32>
    %cst_10 = arith.constant 0.000000e+00 : f32
    %25 = vector.broadcast %cst_10 : f32 to vector<32x256xf32>
    %26 = arith.maximumf %24, %25 : vector<32x256xf32>
    %c0_11 = arith.constant 0 : index
    %c0_12 = arith.constant 0 : index
    %c0_13 = arith.constant 0 : index
    %27 = vector.load %arg5[%c0_11, %c0_12, %c0_13] : memref<3x32x32xf32, #tpu.memory_space<vmem>>, vector<1x32x32xf32>
    %28 = vector.shape_cast %27 : vector<1x32x32xf32> to vector<32x32xf32>
    %cst_14 = arith.constant dense<0.000000e+00> : vector<32x256xf32>
    %29 = tpu.matmul %28, %26, %cst_14 {dimension_numbers = #tpu.dot_dimension_numbers<[1], [0], [0], [1], [0, 0, 1, 1], [], []>} : vector<32x32xf32>, vector<32x256xf32>, vector<32x256xf32> -> vector<32x256xf32>
    %c0_15 = arith.constant 0 : index
    %c0_16 = arith.constant 0 : index
    %c0_17 = arith.constant 0 : index
    %30 = vector.load %arg6[%c0_15, %c0_16, %c0_17] : memref<3x32x1xf32, #tpu.memory_space<vmem>>, vector<1x32x1xf32>
    %31 = vector.shape_cast %30 : vector<1x32x1xf32> to vector<32x1xf32>
    %32 = vector.broadcast %31 : vector<32x1xf32> to vector<32x256xf32>
    %33 = arith.addf %29, %32 : vector<32x256xf32>
    %34 = arith.addf %33, %14 : vector<32x256xf32>
    %35 = arith.mulf %34, %34 : vector<32x256xf32>
    %cst_18 = arith.constant dense<0.000000e+00> : vector<256xf32>
    %36 = vector.multi_reduction <add>, %35, %cst_18 [0] : vector<32x256xf32> to vector<256xf32>
    %37 = vector.shape_cast %36 : vector<256xf32> to vector<1x256xf32>
    %cst_19 = arith.constant 3.125000e-02 : f32
    %38 = vector.broadcast %cst_19 : f32 to vector<1x256xf32>
    %39 = arith.mulf %37, %38 : vector<1x256xf32>
    %cst_20 = arith.constant 9.99999996E-13 : f32
    %40 = vector.broadcast %cst_20 : f32 to vector<1x256xf32>
    %41 = arith.addf %39, %40 : vector<1x256xf32>
    %42 = math.rsqrt %41 : vector<1x256xf32>
    %43 = vector.broadcast %42 : vector<1x256xf32> to vector<32x256xf32>
    %44 = arith.mulf %34, %43 : vector<32x256xf32>
    %cst_21 = arith.constant 0.000000e+00 : f32
    %45 = vector.broadcast %cst_21 : f32 to vector<32x256xf32>
    %46 = arith.maximumf %44, %45 : vector<32x256xf32>
    %c1 = arith.constant 1 : index
    %c0_22 = arith.constant 0 : index
    %c0_23 = arith.constant 0 : index
    %47 = vector.load %arg5[%c1, %c0_22, %c0_23] : memref<3x32x32xf32, #tpu.memory_space<vmem>>, vector<1x32x32xf32>
    %48 = vector.shape_cast %47 : vector<1x32x32xf32> to vector<32x32xf32>
    %cst_24 = arith.constant dense<0.000000e+00> : vector<32x256xf32>
    %49 = tpu.matmul %48, %46, %cst_24 {dimension_numbers = #tpu.dot_dimension_numbers<[1], [0], [0], [1], [0, 0, 1, 1], [], []>} : vector<32x32xf32>, vector<32x256xf32>, vector<32x256xf32> -> vector<32x256xf32>
    %c1_25 = arith.constant 1 : index
    %c0_26 = arith.constant 0 : index
    %c0_27 = arith.constant 0 : index
    %50 = vector.load %arg6[%c1_25, %c0_26, %c0_27] : memref<3x32x1xf32, #tpu.memory_space<vmem>>, vector<1x32x1xf32>
    %51 = vector.shape_cast %50 : vector<1x32x1xf32> to vector<32x1xf32>
    %52 = vector.broadcast %51 : vector<32x1xf32> to vector<32x256xf32>
    %53 = arith.addf %49, %52 : vector<32x256xf32>
    %54 = arith.addf %53, %34 : vector<32x256xf32>
    %55 = arith.mulf %54, %54 : vector<32x256xf32>
    %cst_28 = arith.constant dense<0.000000e+00> : vector<256xf32>
    %56 = vector.multi_reduction <add>, %55, %cst_28 [0] : vector<32x256xf32> to vector<256xf32>
    %57 = vector.shape_cast %56 : vector<256xf32> to vector<1x256xf32>
    %cst_29 = arith.constant 3.125000e-02 : f32
    %58 = vector.broadcast %cst_29 : f32 to vector<1x256xf32>
    %59 = arith.mulf %57, %58 : vector<1x256xf32>
    %cst_30 = arith.constant 9.99999996E-13 : f32
    %60 = vector.broadcast %cst_30 : f32 to vector<1x256xf32>
    %61 = arith.addf %59, %60 : vector<1x256xf32>
    %62 = math.rsqrt %61 : vector<1x256xf32>
    %63 = vector.broadcast %62 : vector<1x256xf32> to vector<32x256xf32>
    %64 = arith.mulf %54, %63 : vector<32x256xf32>
    %cst_31 = arith.constant 0.000000e+00 : f32
    %65 = vector.broadcast %cst_31 : f32 to vector<32x256xf32>
    %66 = arith.maximumf %64, %65 : vector<32x256xf32>
    %c2 = arith.constant 2 : index
    %c0_32 = arith.constant 0 : index
    %c0_33 = arith.constant 0 : index
    %67 = vector.load %arg5[%c2, %c0_32, %c0_33] : memref<3x32x32xf32, #tpu.memory_space<vmem>>, vector<1x32x32xf32>
    %68 = vector.shape_cast %67 : vector<1x32x32xf32> to vector<32x32xf32>
    %cst_34 = arith.constant dense<0.000000e+00> : vector<32x256xf32>
    %69 = tpu.matmul %68, %66, %cst_34 {dimension_numbers = #tpu.dot_dimension_numbers<[1], [0], [0], [1], [0, 0, 1, 1], [], []>} : vector<32x32xf32>, vector<32x256xf32>, vector<32x256xf32> -> vector<32x256xf32>
    %c2_35 = arith.constant 2 : index
    %c0_36 = arith.constant 0 : index
    %c0_37 = arith.constant 0 : index
    %70 = vector.load %arg6[%c2_35, %c0_36, %c0_37] : memref<3x32x1xf32, #tpu.memory_space<vmem>>, vector<1x32x1xf32>
    %71 = vector.shape_cast %70 : vector<1x32x1xf32> to vector<32x1xf32>
    %72 = vector.broadcast %71 : vector<32x1xf32> to vector<32x256xf32>
    %73 = arith.addf %69, %72 : vector<32x256xf32>
    %74 = arith.addf %73, %54 : vector<32x256xf32>
    %75 = arith.mulf %74, %74 : vector<32x256xf32>
    %cst_38 = arith.constant dense<0.000000e+00> : vector<256xf32>
    %76 = vector.multi_reduction <add>, %75, %cst_38 [0] : vector<32x256xf32> to vector<256xf32>
    %77 = vector.shape_cast %76 : vector<256xf32> to vector<1x256xf32>
    %cst_39 = arith.constant 3.125000e-02 : f32
    %78 = vector.broadcast %cst_39 : f32 to vector<1x256xf32>
    %79 = arith.mulf %77, %78 : vector<1x256xf32>
    %cst_40 = arith.constant 9.99999996E-13 : f32
    %80 = vector.broadcast %cst_40 : f32 to vector<1x256xf32>
    %81 = arith.addf %79, %80 : vector<1x256xf32>
    %82 = math.rsqrt %81 : vector<1x256xf32>
    %83 = vector.broadcast %82 : vector<1x256xf32> to vector<32x256xf32>
    %84 = arith.mulf %74, %83 : vector<32x256xf32>
    %cst_41 = arith.constant 0.000000e+00 : f32
    %85 = vector.broadcast %cst_41 : f32 to vector<32x256xf32>
    %86 = arith.maximumf %84, %85 : vector<32x256xf32>
    %c0_42 = arith.constant 0 : index
    %c0_43 = arith.constant 0 : index
    %87 = vector.load %arg7[%c0_42, %c0_43] : memref<8x32xf32, #tpu.memory_space<vmem>>, vector<8x32xf32>
    %cst_44 = arith.constant dense<0.000000e+00> : vector<8x256xf32>
    %88 = tpu.matmul %87, %86, %cst_44 {dimension_numbers = #tpu.dot_dimension_numbers<[1], [0], [0], [1], [0, 0, 1, 1], [], []>} : vector<8x32xf32>, vector<32x256xf32>, vector<8x256xf32> -> vector<8x256xf32>
    %c0_45 = arith.constant 0 : index
    %c0_46 = arith.constant 0 : index
    %89 = vector.load %arg8[%c0_45, %c0_46] : memref<8x1xf32, #tpu.memory_space<vmem>>, vector<8x1xf32>
    %90 = vector.broadcast %89 : vector<8x1xf32> to vector<8x256xf32>
    %91 = arith.addf %88, %90 : vector<8x256xf32>
    %c0_47 = arith.constant 0 : index
    %c0_48 = arith.constant 0 : index
    %92 = vector.load %arg9[%c0_47, %c0_48] : memref<8x256xf32, #tpu.memory_space<vmem>>, vector<8x256xf32>
    tpu.vector_store %arg9[%c0_47, %c0_48], %91 {strides = array<i32>} : memref<8x256xf32, #tpu.memory_space<vmem>>, vector<8x256xf32>,
    return
  }
  func.func @transform_0(%arg0: i32) -> (i32, i32) {
    %c0_i32 = arith.constant 0 : i32
    %c0_i32_0 = arith.constant 0 : i32
    return %c0_i32, %arg0 : i32, i32
  }
  func.func @transform_1(%arg0: i32) -> (i32, i32) {
    %c0_i32 = arith.constant 0 : i32
    %c0_i32_0 = arith.constant 0 : i32
    %c0_i32_1 = arith.constant 0 : i32
    return %c0_i32, %c0_i32_0 : i32, i32
  }
  func.func @transform_2(%arg0: i32) -> (i32, i32) {
    %c0_i32 = arith.constant 0 : i32
    %c0_i32_0 = arith.constant 0 : i32
    %c0_i32_1 = arith.constant 0 : i32
    return %c0_i32, %c0_i32_0 : i32, i32
  }
  func.func @transform_3(%arg0: i32) -> (i32, i32) {
    %c0_i32 = arith.constant 0 : i32
    %c0_i32_0 = arith.constant 0 : i32
    %c0_i32_1 = arith.constant 0 : i32
    return %c0_i32, %c0_i32_0 : i32, i32
  }
  func.func @transform_4(%arg0: i32) -> (i32, i32, i32) {
    %c0_i32 = arith.constant 0 : i32
    %c0_i32_0 = arith.constant 0 : i32
    %c0_i32_1 = arith.constant 0 : i32
    %c0_i32_2 = arith.constant 0 : i32
    return %c0_i32, %c0_i32_0, %c0_i32_1 : i32, i32, i32
  }
  func.func @transform_5(%arg0: i32) -> (i32, i32, i32) {
    %c0_i32 = arith.constant 0 : i32
    %c0_i32_0 = arith.constant 0 : i32
    %c0_i32_1 = arith.constant 0 : i32
    %c0_i32_2 = arith.constant 0 : i32
    return %c0_i32, %c0_i32_0, %c0_i32_1 : i32, i32, i32
  }
  func.func @transform_6(%arg0: i32) -> (i32, i32) {
    %c0_i32 = arith.constant 0 : i32
    %c0_i32_0 = arith.constant 0 : i32
    %c0_i32_1 = arith.constant 0 : i32
    return %c0_i32, %c0_i32_0 : i32, i32
  }
  func.func @transform_7(%arg0: i32) -> (i32, i32) {
    %c0_i32 = arith.constant 0 : i32
    %c0_i32_0 = arith.constant 0 : i32
    %c0_i32_1 = arith.constant 0 : i32
    return %c0_i32, %c0_i32_0 : i32, i32
  }
  func.func @transform_8(%arg0: i32) -> (i32, i32) {
    %c0_i32 = arith.constant 0 : i32
    %c0_i32_0 = arith.constant 0 : i32
    return %c0_i32, %arg0 : i32, i32
  }
}

</mosaic_0001>

<llo_original>
// kernel: tpu_custom_call.1
$region0: #{tpu_custom_call.1}
  #allocation0 [shape = 'u32[]', space=smem, size = 0x4, offset = 0x4, fixed_abs, tag = 'smem constant byte address 0x4 - core index']
  #allocation1 [shape = 'u32[144,128]{1,0:T(1,128)}', space=vmem, size = 0x12000, scoped, tag = 'internal scratch']
  %s0 = inlined_call_operand.vmem [shape: f32[1,256], index: 0, kind: input, shape index: {}]
  %s1 = inlined_call_operand.vmem [shape: f32[8,2], index: 1, kind: input, shape index: {}]
  %s2 = inlined_call_operand.vmem [shape: f32[32,8], index: 2, kind: input, shape index: {}]
  %s3 = inlined_call_operand.vmem [shape: f32[32,1], index: 3, kind: input, shape index: {}]
  %s4 = inlined_call_operand.vmem [shape: f32[3,32,32], index: 4, kind: input, shape index: {}]
  %s5 = inlined_call_operand.vmem [shape: f32[3,32,1], index: 5, kind: input, shape index: {}]
  %s6 = inlined_call_operand.vmem [shape: f32[8,32], index: 6, kind: input, shape index: {}]
  %s7 = inlined_call_operand.vmem [shape: f32[8,1], index: 7, kind: input, shape index: {}]
  %s8 = inlined_call_operand.hbm [shape: f32[8,256], index: 8, kind: output, shape index: {}]
  %s9 = sld [smem:[#allocation0]]
  $region42: #{tpu_custom_call.1} parent=0
    _
  %s11 = ssub.s32 1, %s9
  %s12 = scalar_select 0, %s11, %s9
  $region1: #{tpu_custom_call.1} parent=0
    #allocation2 [shape = 'u8[8192]{0}', space=vmem, size = 0x2000, scoped, tag = 'output window, operand 0, single buffered']
    #allocation3 [shape = 's32[1]{0}', space=sflag, size = 0x4, scoped, tag = 'scoped memory for tpu_custom_call.1']
    %13 = vsyncpa [#allocation3], 0
    // Predicated region
    $region2: #{tpu_custom_call.1} parent=1 // pred_check
      _
    $region3: #{tpu_custom_call.1} parent=1 // pred_check_branch
      %15 = sbr.rel (0) target = $region5
    $region4: #{tpu_custom_call.1} parent=1 // pred_region
      _
    $region5: #{tpu_custom_call.1} parent=1 // pred_fallthru
      _
    // Predicated region
    $region6: #{tpu_custom_call.1} parent=1 // pred_check
      _
    $region7: #{tpu_custom_call.1} parent=1 // pred_check_branch
      %17 = sbr.rel (0) target = $region9
    $region8: #{tpu_custom_call.1} parent=1 // pred_region
      _
    $region9: #{tpu_custom_call.1} parent=1 // pred_fallthru
      _
    // Predicated region
    $region10: #{tpu_custom_call.1} parent=1 // pred_check
      _
    $region11: #{tpu_custom_call.1} parent=1 // pred_check_branch
      %19 = sbr.rel (0) target = $region13
    $region12: #{tpu_custom_call.1} parent=1 // pred_region
      _
    $region13: #{tpu_custom_call.1} parent=1 // pred_fallthru
      _
    // Predicated region
    $region14: #{tpu_custom_call.1} parent=1 // pred_check
      _
    $region15: #{tpu_custom_call.1} parent=1 // pred_check_branch
      %21 = sbr.rel (0) target = $region17
    $region16: #{tpu_custom_call.1} parent=1 // pred_region
      _
    $region17: #{tpu_custom_call.1} parent=1 // pred_fallthru
      _
    // Predicated region
    $region18: #{tpu_custom_call.1} parent=1 // pred_check
      _
    $region19: #{tpu_custom_call.1} parent=1 // pred_check_branch
      %23 = sbr.rel (0) target = $region21
    $region20: #{tpu_custom_call.1} parent=1 // pred_region
      _
    $region21: #{tpu_custom_call.1} parent=1 // pred_fallthru
      _
    // Predicated region
    $region22: #{tpu_custom_call.1} parent=1 // pred_check
      _
    $region23: #{tpu_custom_call.1} parent=1 // pred_check_branch
      %25 = sbr.rel (0) target = $region25
    $region24: #{tpu_custom_call.1} parent=1 // pred_region
      _
    $region25: #{tpu_custom_call.1} parent=1 // pred_fallthru
      _
    // Predicated region
    $region26: #{tpu_custom_call.1} parent=1 // pred_check
      _
    $region27: #{tpu_custom_call.1} parent=1 // pred_check_branch
      %27 = sbr.rel (0) target = $region29
    $region28: #{tpu_custom_call.1} parent=1 // pred_region
      _
    $region29: #{tpu_custom_call.1} parent=1 // pred_fallthru
      _
    // Predicated region
    $region30: #{tpu_custom_call.1} parent=1 // pred_check
      _
    $region31: #{tpu_custom_call.1} parent=1 // pred_check_branch
      %29 = sbr.rel (0) target = $region33
    $region32: #{tpu_custom_call.1} parent=1 // pred_region
      _
    $region33: #{tpu_custom_call.1} parent=1 // pred_fallthru
      _
    %v30 = vld [vmem:[%s1] sm:$0xff]
    %v31 = vld [vmem:[%s0] sm:$0x3]
    %33 = vset.pattern.permute.xlu0 0
    %34 = vperm.xlu0 %33, %v30
    %v35 = vpop.permute.xlu0 %34
    %v38 = vlaneseq
    %v39 = vshrl.u32 %v38, 7
    %v40 = vsub.s32 0, %v39
    %v41 = vrot.slane %v31, %v40
    %v42 = vlaneseq
    %v43 = vshrl.u32 %v42, 7
    %v44 = vsub.s32 1, %v43
    %v45 = vrot.slane %v31, %v44
    %v48 = vmul.f32 %v35, %v41
    %v49 = vmul.f32 %v35, %v45
    %50 = vset.pattern.permute.xlu0 1
    %51 = vperm.xlu0 %50, %v30
    %v52 = vpop.permute.xlu0 %51
    %v54 = vadd.f32 %v48, %v52
    %v55 = vadd.f32 %v49, %v52
    %v56 = vand.u32 2147483647, %v54
    %vm57 = vcmp.le.f32.partialorder %v56, 0.7853982
    %vm58 = vcmp.lt.s32.totalorder %v54, 0
    %v59 = vand.u32 %v54, 2139095040
    %v60 = vshrl.u32 %v59, 23
    %v61 = vsub.s32 %v60, 127
    %v62 = vand.u32 2147483647, %v54
    %v63 = vand.u32 %v62, 8388607
    %v64 = vor.u32 %v63, 8388608
    %v65 = vsub.s32 0, %v64
    %v66 = vadd.s32 %v61, 1
    %vm67 = vcmp.gt.s32.totalorder %v66, 0
    %v68 = vsel %vm67, %v66, 0
    %v69 = vshrl.u32 %v68, 5
    %v70 = vand.u32 %v68, 31
    %v71 = vsub.s32 32, %v70
    %v72 = vshrl.u32 683565275, %v71
    %v73 = vshll.u32 683565275, %v70
    %v74 = vshrl.u32 2475754826, %v71
    %v75 = vor.u32 %v73, %v74
    %v76 = vshll.u32 2475754826, %v70
    %v77 = vshrl.u32 2131351028, %v71
    %v78 = vor.u32 %v76, %v77
    %v79 = vshll.u32 2131351028, %v70
    %v80 = vshrl.u32 2102212464, %v71
    %v81 = vor.u32 %v79, %v80
    %v82 = vshll.u32 2102212464, %v70
    %v83 = vshrl.u32 920167782, %v71
    %v84 = vor.u32 %v82, %v83
    %v85 = vshll.u32 920167782, %v70
    %v86 = vshrl.u32 1326507024, %v71
    %v87 = vor.u32 %v85, %v86
    %vm88 = vcmp.lt.s32.totalorder %v69, 1
    %vm89 = vcmp.lt.s32.totalorder %v69, 2
    %vm90 = vcmp.lt.s32.totalorder %v69, 3
    %vm91 = vcmp.lt.s32.totalorder %v69, 4
    %v92 = vsel %vm88, %v72, %v75
    %v93 = vsel %vm91, %v81, 2102212464
    %v94 = vsel %vm90, %v78, %v93
    %v95 = vsel %vm89, %v92, %v94
    %v96 = vsel %vm88, %v75, %v78
    %v97 = vsel %vm91, %v84, 920167782
    %v98 = vsel %vm90, %v81, %v97
    %v99 = vsel %vm89, %v96, %v98
    %v100 = vsel %vm88, %v78, %v81
    %v101 = vsel %vm91, %v87, 1326507024
    %v102 = vsel %vm90, %v84, %v101
    %v103 = vsel %vm89, %v100, %v102
    %v104 = vshll.u32 %v64, 8
    %v105 = vmul.u32.u64.compose %v104, %v103
    %v106 = vextract.low.u32 %v105
    %v107 = vextract.high.u32 %v105
    %v108 = vmul.u32.u64.compose %v104, %v99
    %v109 = vextract.low.u32 %v108
    %v110 = vextract.high.u32 %v108
    %v111 = vmul.u32 %v104, %v95
    %v112 = vadd.s32 %v107, %v109
    %vm113 = vc.u32 %v107, %v109
    %v114 = vadd.s32 %v110, 1
    %v115 = vsel %vm113, %v114, %v110
    %v116 = vadd.s32 %v111, %v115
    %v117 = vadd.s32 %v116, 536870912
    %v118 = vshrl.u32 %v117, 30
    %v119 = vshll.u32 %v118, 30
    %v120 = vsub.s32 %v116, %v119
    %vm121 = vcmp.lt.s32.totalorder %v120, 0
    %v122 = vsub.s32 0, %v120
    %v123 = vsel %vm121, %v122, %v120
    %v124 = vclz %v123
    %v125 = vsub.s32 %v124, 2
    %vm126 = vcmp.gt.s32.totalorder 0, %v125
    %v127 = vsel %vm126, 0, %v125
    %v128 = vsub.s32 32, %v127
    %v129 = vshll.u32 %v120, %v127
    %v130 = vshrl.u32 %v112, %v128
    %v131 = vor.u32 %v129, %v130
    %v132 = vsub.s32 4294967266, %v127
    %v133 = vadd.s32 %v132, 127
    %v134 = vshll.u32 %v133, 23
    %v135 = vor.u32 4788187, %v134
    %v136 = vand.u32 2147483647, %v135
    %v138 = vcvt.s32.f32 %v131
    %v139 = vmul.f32 %v138, %v136
    %v140 = vxor.u32 %v139, 2147483648
    %v141 = vsel %vm58, %v140, %v139
    %v142 = vsub.s32 4, %v118
    %v143 = vsel %vm58, %v142, %v118
    %v144 = vsel %vm57, %v54, %v141
    %v145 = vsel %vm57, 0, %v143
    %v146 = vcosq.f32.pop %v144
    %v147 = vsinq.f32.pop %v144
    %vm148 = vweird.f32 %v54
    %v149 = vadd.s32 %v145, 3
    %v150 = vand.u32 %v149, 3
    %vm151 = vcmp.lt.s32.totalorder %v150, 2
    %vm152 = vcmp.eq.s32.totalorder %v150, 0
    %v153 = vxor.u32 %v147, 2147483648
    %v154 = vsel %vm152, %v146, %v153
    %vm155 = vcmp.eq.s32.totalorder %v150, 2
    %v156 = vxor.u32 %v146, 2147483648
    %v157 = vsel %vm155, %v156, %v147
    %v158 = vsel %vm151, %v154, %v157
    %v159 = vsel %vm148, nan, %v158
    %v160 = vand.u32 2147483647, %v55
    %vm161 = vcmp.le.f32.partialorder %v160, 0.7853982
    %vm162 = vcmp.lt.s32.totalorder %v55, 0
    %v163 = vand.u32 %v55, 2139095040
    %v164 = vshrl.u32 %v163, 23
    %v165 = vsub.s32 %v164, 127
    %v166 = vand.u32 2147483647, %v55
    %v167 = vand.u32 %v166, 8388607
    %v168 = vor.u32 %v167, 8388608
    %v169 = vsub.s32 0, %v168
    %v170 = vadd.s32 %v165, 1
    %vm171 = vcmp.gt.s32.totalorder %v170, 0
    %v172 = vsel %vm171, %v170, 0
    %v173 = vshrl.u32 %v172, 5
    %v174 = vand.u32 %v172, 31
    %v175 = vsub.s32 32, %v174
    %v176 = vshrl.u32 683565275, %v175
    %v177 = vshll.u32 683565275, %v174
    %v178 = vshrl.u32 2475754826, %v175
    %v179 = vor.u32 %v177, %v178
    %v180 = vshll.u32 2475754826, %v174
    %v181 = vshrl.u32 2131351028, %v175
    %v182 = vor.u32 %v180, %v181
    %v183 = vshll.u32 2131351028, %v174
    %v184 = vshrl.u32 2102212464, %v175
    %v185 = vor.u32 %v183, %v184
    %v186 = vshll.u32 2102212464, %v174
    %v187 = vshrl.u32 920167782, %v175
    %v188 = vor.u32 %v186, %v187
    %v189 = vshll.u32 920167782, %v174
    %v190 = vshrl.u32 1326507024, %v175
    %v191 = vor.u32 %v189, %v190
    %vm192 = vcmp.lt.s32.totalorder %v173, 1
    %vm193 = vcmp.lt.s32.totalorder %v173, 2
    %vm194 = vcmp.lt.s32.totalorder %v173, 3
    %vm195 = vcmp.lt.s32.totalorder %v173, 4
    %v196 = vsel %vm192, %v176, %v179
    %v197 = vsel %vm195, %v185, 2102212464
    %v198 = vsel %vm194, %v182, %v197
    %v199 = vsel %vm193, %v196, %v198
    %v200 = vsel %vm192, %v179, %v182
    %v201 = vsel %vm195, %v188, 920167782
    %v202 = vsel %vm194, %v185, %v201
    %v203 = vsel %vm193, %v200, %v202
    %v204 = vsel %vm192, %v182, %v185
    %v205 = vsel %vm195, %v191, 1326507024
    %v206 = vsel %vm194, %v188, %v205
    %v207 = vsel %vm193, %v204, %v206
    %v208 = vshll.u32 %v168, 8
    %v209 = vmul.u32.u64.compose %v208, %v207
    %v210 = vextract.low.u32 %v209
    %v211 = vextract.high.u32 %v209
    %v212 = vmul.u32.u64.compose %v208, %v203
    %v213 = vextract.low.u32 %v212
    %v214 = vextract.high.u32 %v212
    %v215 = vmul.u32 %v208, %v199
    %v216 = vadd.s32 %v211, %v213
    %vm217 = vc.u32 %v211, %v213
    %v218 = vadd.s32 %v214, 1
    %v219 = vsel %vm217, %v218, %v214
    %v220 = vadd.s32 %v215, %v219
    %v221 = vadd.s32 %v220, 536870912
    %v222 = vshrl.u32 %v221, 30
    %v223 = vshll.u32 %v222, 30
    %v224 = vsub.s32 %v220, %v223
    %vm225 = vcmp.lt.s32.totalorder %v224, 0
    %v226 = vsub.s32 0, %v224
    %v227 = vsel %vm225, %v226, %v224
    %v228 = vclz %v227
    %v229 = vsub.s32 %v228, 2
    %vm230 = vcmp.gt.s32.totalorder 0, %v229
    %v231 = vsel %vm230, 0, %v229
    %v232 = vsub.s32 32, %v231
    %v233 = vshll.u32 %v224, %v231
    %v234 = vshrl.u32 %v216, %v232
    %v235 = vor.u32 %v233, %v234
    %v236 = vsub.s32 4294967266, %v231
    %v237 = vadd.s32 %v236, 127
    %v238 = vshll.u32 %v237, 23
    %v239 = vor.u32 4788187, %v238
    %v240 = vand.u32 2147483647, %v239
    %v242 = vcvt.s32.f32 %v235
    %v243 = vmul.f32 %v242, %v240
    %v244 = vxor.u32 %v243, 2147483648
    %v245 = vsel %vm162, %v244, %v243
    %v246 = vsub.s32 4, %v222
    %v247 = vsel %vm162, %v246, %v222
    %v248 = vsel %vm161, %v55, %v245
    %v249 = vsel %vm161, 0, %v247
    %v250 = vcosq.f32.pop %v248
    %v251 = vsinq.f32.pop %v248
    %vm252 = vweird.f32 %v55
    %v253 = vadd.s32 %v249, 3
    %v254 = vand.u32 %v253, 3
    %vm255 = vcmp.lt.s32.totalorder %v254, 2
    %vm256 = vcmp.eq.s32.totalorder %v254, 0
    %v257 = vxor.u32 %v251, 2147483648
    %v258 = vsel %vm256, %v250, %v257
    %vm259 = vcmp.eq.s32.totalorder %v254, 2
    %v260 = vxor.u32 %v250, 2147483648
    %v261 = vsel %vm259, %v260, %v251
    %v262 = vsel %vm255, %v258, %v261
    %v263 = vsel %vm252, nan, %v262
    %v264 = vld [vmem:[%s2] sm:$0xff]
    %v265 = vld [vmem:[%s2 + $0x8] sm:$0xff]
    %v266 = vld [vmem:[%s2 + $0x10] sm:$0xff]
    %v267 = vld [vmem:[%s2 + $0x18] sm:$0xff]
    %v268 = vld [vmem:[%s3] sm:$0xff]
    %v269 = vld [vmem:[%s3 + $0x8] sm:$0xff]
    %v270 = vld [vmem:[%s3 + $0x10] sm:$0xff]
    %v271 = vld [vmem:[%s3 + $0x18] sm:$0xff]
    %273 = vset.pattern.permute.xlu0 0
    %274 = vperm.xlu0 %273, %v268
    %v275 = vpop.permute.xlu0 %274
    %278 = vset.pattern.permute.xlu0 0
    %279 = vperm.xlu0 %278, %v269
    %v280 = vpop.permute.xlu0 %279
    %283 = vset.pattern.permute.xlu0 0
    %284 = vperm.xlu0 %283, %v270
    %v285 = vpop.permute.xlu0 %284
    %288 = vset.pattern.permute.xlu0 0
    %289 = vperm.xlu0 %288, %v271
    %v290 = vpop.permute.xlu0 %289
    %vm292 = vcmask 64512
    %v294 = vsel %vm292, %v264, 0
    %v297 = vsel %vm292, %v265, 0
    %v300 = vsel %vm292, %v266, 0
    %v303 = vsel %vm292, %v267, 0
    %305 = vmatprep.subr.mxu0 %v263
    %306 = vmatpush1.msra.mxu0 %v159
    %307 = vmatprep.subr.mxu0 0.0
    %308 = vmatpush1.msra.mxu0 0.0
    %309 = vmatprep.subr.mxu0 0.0
    %310 = vmatpush1.msra.mxu0 0.0
    %311 = vmatprep.subr.mxu0 0.0
    %312 = vmatpush1.msra.mxu0 0.0
    %313 = vmatprep.subr.mxu0 0.0
    %314 = vmatpush1.msra.mxu0 0.0
    %315 = vmatprep.subr.mxu0 0.0
    %316 = vmatpush1.msra.mxu0 0.0
    %317 = vmatprep.subr.mxu0 0.0
    %318 = vmatpush1.msra.mxu0 0.0
    %319 = vmatprep.subr.mxu0 0.0
    %320 = vmatpush1.msra.mxu0 0.0
    %321 = vmatprep.subr.mxu0 0.0
    %322 = vmatpush1.msra.mxu0 0.0
    %323 = vmatprep.subr.mxu0 0.0
    %324 = vmatpush1.msra.mxu0 0.0
    %325 = vmatprep.subr.mxu0 0.0
    %326 = vmatpush1.msra.mxu0 0.0
    %327 = vmatprep.subr.mxu0 0.0
    %328 = vmatpush1.msra.mxu0 0.0
    %329 = vmatprep.subr.mxu0 0.0
    %330 = vmatpush1.msra.mxu0 0.0
    %331 = vmatprep.subr.mxu0 0.0
    %332 = vmatpush1.msra.mxu0 0.0
    %333 = vmatprep.subr.mxu0 0.0
    %334 = vmatpush1.msra.mxu0 0.0
    %335 = vmatprep.subr.mxu0 0.0
    %336 = vmatpush1.msra.mxu0 0.0
    %337 = vmatprep.subr.mxu0 0.0
    %338 = vmatpush1.msra.mxu0 0.0
    %339 = vmatprep.subr.mxu0 0.0
    %340 = vmatpush1.msra.mxu0 0.0
    %341 = vmatprep.subr.mxu0 0.0
    %342 = vmatpush1.msra.mxu0 0.0
    %343 = vmatprep.subr.mxu0 0.0
    %344 = vmatpush1.msra.mxu0 0.0
    %345 = vmatprep.subr.mxu0 0.0
    %346 = vmatpush1.msra.mxu0 0.0
    %347 = vmatprep.subr.mxu0 0.0
    %348 = vmatpush1.msra.mxu0 0.0
    %349 = vmatprep.subr.mxu0 0.0
    %350 = vmatpush1.msra.mxu0 0.0
    %351 = vmatprep.subr.mxu0 0.0
    %352 = vmatpush1.msra.mxu0 0.0
    %353 = vmatprep.subr.mxu0 0.0
    %354 = vmatpush1.msra.mxu0 0.0
    %355 = vmatprep.subr.mxu0 0.0
    %356 = vmatpush1.msra.mxu0 0.0
    %357 = vmatprep.subr.mxu0 0.0
    %358 = vmatpush1.msra.mxu0 0.0
    %359 = vmatprep.subr.mxu0 0.0
    %360 = vmatpush1.msra.mxu0 0.0
    %361 = vmatprep.subr.mxu0 0.0
    %362 = vmatpush1.msra.mxu0 0.0
    %363 = vmatprep.subr.mxu0 0.0
    %364 = vmatpush1.msra.mxu0 0.0
    %365 = vmatprep.subr.mxu0 0.0
    %366 = vmatpush1.msra.mxu0 0.0
    %367 = vmatprep.subr.mxu0 0.0
    %368 = vmatpush1.msra.mxu0 0.0
    %369 = vmatprep.mubr.f32.mxu0 0.0
    %370 = vmatmul.mubr.f32.gmra.mrb[0].mxu0 %v294
    %v371 = vpop.f32.mrb[0].mxu0
    %v372 = vadd.f32 %v275, %v371
    %v373 = vpop.f32.mrb[0].mxu0
    %v374 = vadd.f32 %v275, %v373
    %375 = vmatprep.mubr.f32.mxu0 0.0
    %376 = vmatmul.mubr.f32.gmra.mrb[0].mxu0 %v297
    %v377 = vpop.f32.mrb[0].mxu0
    %v378 = vadd.f32 %v280, %v377
    %v379 = vpop.f32.mrb[0].mxu0
    %v380 = vadd.f32 %v280, %v379
    %381 = vmatprep.mubr.f32.mxu0 0.0
    %382 = vmatmul.mubr.f32.gmra.mrb[0].mxu0 %v300
    %v383 = vpop.f32.mrb[0].mxu0
    %v384 = vadd.f32 %v285, %v383
    %v385 = vpop.f32.mrb[0].mxu0
    %v386 = vadd.f32 %v285, %v385
    %387 = vmatprep.mubr.f32.mxu0 0.0
    %388 = vmatmul.mubr.f32.gmra.mrb[0].mxu0 %v303
    %v389 = vpop.f32.mrb[0].mxu0
    %v390 = vadd.f32 %v290, %v389
    %v391 = vpop.f32.mrb[0].mxu0
    %v392 = vadd.f32 %v290, %v391
    %393 = vdwg.mxu0
    %v394 = vmul.f32 %v372, %v372
    %v395 = vmul.f32 %v374, %v374
    %v396 = vmul.f32 %v378, %v378
    %v397 = vmul.f32 %v380, %v380
    %v398 = vmul.f32 %v384, %v384
    %v399 = vmul.f32 %v386, %v386
    %v400 = vmul.f32 %v390, %v390
    %v401 = vmul.f32 %v392, %v392
    %v402 = vadd.f32 %v394, %v396
    %v403 = vadd.f32 %v402, %v398
    %v404 = vadd.f32 %v403, %v400
    %v405 = vrot.slane %v404, 4
    %v406 = vadd.f32 %v404, %v405
    %v407 = vrot.slane %v406, 2
    %v408 = vadd.f32 %v406, %v407
    %v409 = vrot.slane %v408, 1
    %v410 = vadd.f32 %v408, %v409
    %v411 = vadd.f32 %v395, %v397
    %v412 = vadd.f32 %v411, %v399
    %v413 = vadd.f32 %v412, %v401
    %v414 = vrot.slane %v413, 4
    %v415 = vadd.f32 %v413, %v414
    %v416 = vrot.slane %v415, 2
    %v417 = vadd.f32 %v415, %v416
    %v418 = vrot.slane %v417, 1
    %v419 = vadd.f32 %v417, %v418
    %v420 = vmul.f32 %v410, 0.03125
    %v421 = vmul.f32 %v419, 0.03125
    %v422 = vadd.f32 %v420, 1e-12
    %v423 = vadd.f32 %v421, 1e-12
    %v424 = vrsqrt.pop %v422
    %v425 = vrsqrt.pop %v423
    %v426 = vmul.f32 %v372, %v424
    %v427 = vmul.f32 %v374, %v425
    %v428 = vmul.f32 %v378, %v424
    %v429 = vmul.f32 %v380, %v425
    %v430 = vmul.f32 %v384, %v424
    %v431 = vmul.f32 %v386, %v425
    %v432 = vmul.f32 %v390, %v424
    %v433 = vmul.f32 %v392, %v425
    %v434 = vmax.f32 %v426, 0.0
    %v435 = vmax.f32 %v427, 0.0
    %v436 = vmax.f32 %v428, 0.0
    %v437 = vmax.f32 %v429, 0.0
    %v438 = vmax.f32 %v430, 0.0
    %v439 = vmax.f32 %v431, 0.0
    %v440 = vmax.f32 %v432, 0.0
    %v441 = vmax.f32 %v433, 0.0
    %v442 = vld [vmem:[%s4] sm:$0xff]
    %v443 = vld [vmem:[%s4 + $0x8] sm:$0xff]
    %v444 = vld [vmem:[%s4 + $0x10] sm:$0xff]
    %v445 = vld [vmem:[%s4 + $0x18] sm:$0xff]
    %v446 = vld [vmem:[%s5] sm:$0xff]
    %v447 = vld [vmem:[%s5 + $0x8] sm:$0xff]
    %v448 = vld [vmem:[%s5 + $0x10] sm:$0xff]
    %v449 = vld [vmem:[%s5 + $0x18] sm:$0xff]
    %451 = vset.pattern.permute.xlu0 0
    %452 = vperm.xlu0 %451, %v446
    %v453 = vpop.permute.xlu0 %452
    %456 = vset.pattern.permute.xlu0 0
    %457 = vperm.xlu0 %456, %v447
    %v458 = vpop.permute.xlu0 %457
    %461 = vset.pattern.permute.xlu0 0
    %462 = vperm.xlu0 %461, %v448
    %v463 = vpop.permute.xlu0 %462
    %466 = vset.pattern.permute.xlu0 0
    %467 = vperm.xlu0 %466, %v449
    %v468 = vpop.permute.xlu0 %467
    %vm470 = vcmask 261120
    %v472 = vsel %vm470, %v442, 0
    %v475 = vsel %vm470, %v443, 0
    %v478 = vsel %vm470, %v444, 0
    %v481 = vsel %vm470, %v445, 0
    %483 = vmatprep.subr.mxu0 %v435
    %484 = vmatpush1.msra.mxu0 %v434
    %485 = vmatprep.subr.mxu0 %v437
    %486 = vmatpush1.msra.mxu0 %v436
    %487 = vmatprep.subr.mxu0 %v439
    %488 = vmatpush1.msra.mxu0 %v438
    %489 = vmatprep.subr.mxu0 %v441
    %490 = vmatpush1.msra.mxu0 %v440
    %491 = vmatprep.subr.mxu0 0.0
    %492 = vmatpush1.msra.mxu0 0.0
    %493 = vmatprep.subr.mxu0 0.0
    %494 = vmatpush1.msra.mxu0 0.0
    %495 = vmatprep.subr.mxu0 0.0
    %496 = vmatpush1.msra.mxu0 0.0
    %497 = vmatprep.subr.mxu0 0.0
    %498 = vmatpush1.msra.mxu0 0.0
    %499 = vmatprep.subr.mxu0 0.0
    %500 = vmatpush1.msra.mxu0 0.0
    %501 = vmatprep.subr.mxu0 0.0
    %502 = vmatpush1.msra.mxu0 0.0
    %503 = vmatprep.subr.mxu0 0.0
    %504 = vmatpush1.msra.mxu0 0.0
    %505 = vmatprep.subr.mxu0 0.0
    %506 = vmatpush1.msra.mxu0 0.0
    %507 = vmatprep.subr.mxu0 0.0
    %508 = vmatpush1.msra.mxu0 0.0
    %509 = vmatprep.subr.mxu0 0.0
    %510 = vmatpush1.msra.mxu0 0.0
    %511 = vmatprep.subr.mxu0 0.0
    %512 = vmatpush1.msra.mxu0 0.0
    %513 = vmatprep.subr.mxu0 0.0
    %514 = vmatpush1.msra.mxu0 0.0
    %515 = vmatprep.subr.mxu0 0.0
    %516 = vmatpush1.msra.mxu0 0.0
    %517 = vmatprep.subr.mxu0 0.0
    %518 = vmatpush1.msra.mxu0 0.0
    %519 = vmatprep.subr.mxu0 0.0
    %520 = vmatpush1.msra.mxu0 0.0
    %521 = vmatprep.subr.mxu0 0.0
    %522 = vmatpush1.msra.mxu0 0.0
    %523 = vmatprep.subr.mxu0 0.0
    %524 = vmatpush1.msra.mxu0 0.0
    %525 = vmatprep.subr.mxu0 0.0
    %526 = vmatpush1.msra.mxu0 0.0
    %527 = vmatprep.subr.mxu0 0.0
    %528 = vmatpush1.msra.mxu0 0.0
    %529 = vmatprep.subr.mxu0 0.0
    %530 = vmatpush1.msra.mxu0 0.0
    %531 = vmatprep.subr.mxu0 0.0
    %532 = vmatpush1.msra.mxu0 0.0
    %533 = vmatprep.subr.mxu0 0.0
    %534 = vmatpush1.msra.mxu0 0.0
    %535 = vmatprep.subr.mxu0 0.0
    %536 = vmatpush1.msra.mxu0 0.0
    %537 = vmatprep.subr.mxu0 0.0
    %538 = vmatpush1.msra.mxu0 0.0
    %539 = vmatprep.subr.mxu0 0.0
    %540 = vmatpush1.msra.mxu0 0.0
    %541 = vmatprep.subr.mxu0 0.0
    %542 = vmatpush1.msra.mxu0 0.0
    %543 = vmatprep.subr.mxu0 0.0
    %544 = vmatpush1.msra.mxu0 0.0
    %545 = vmatprep.subr.mxu0 0.0
    %546 = vmatpush1.msra.mxu0 0.0
    %547 = vmatprep.mubr.f32.mxu0 0.0
    %548 = vmatmul.mubr.f32.gmra.mrb[0].mxu0 %v472
    %v549 = vpop.f32.mrb[0].mxu0
    %v550 = vadd.f32 %v453, %v549
    %v551 = vpop.f32.mrb[0].mxu0
    %v552 = vadd.f32 %v453, %v551
    %553 = vmatprep.mubr.f32.mxu0 0.0
    %554 = vmatmul.mubr.f32.gmra.mrb[0].mxu0 %v475
    %v555 = vpop.f32.mrb[0].mxu0
    %v556 = vadd.f32 %v458, %v555
    %v557 = vpop.f32.mrb[0].mxu0
    %v558 = vadd.f32 %v458, %v557
    %559 = vmatprep.mubr.f32.mxu0 0.0
    %560 = vmatmul.mubr.f32.gmra.mrb[0].mxu0 %v478
    %v561 = vpop.f32.mrb[0].mxu0
    %v562 = vadd.f32 %v463, %v561
    %v563 = vpop.f32.mrb[0].mxu0
    %v564 = vadd.f32 %v463, %v563
    %565 = vmatprep.mubr.f32.mxu0 0.0
    %566 = vmatmul.mubr.f32.gmra.mrb[0].mxu0 %v481
    %v567 = vpop.f32.mrb[0].mxu0
    %v568 = vadd.f32 %v468, %v567
    %v569 = vpop.f32.mrb[0].mxu0
    %v570 = vadd.f32 %v468, %v569
    %571 = vdwg.mxu0
    %v572 = vadd.f32 %v550, %v372
    %v573 = vadd.f32 %v552, %v374
    %v574 = vadd.f32 %v556, %v378
    %v575 = vadd.f32 %v558, %v380
    %v576 = vadd.f32 %v562, %v384
    %v577 = vadd.f32 %v564, %v386
    %v578 = vadd.f32 %v568, %v390
    %v579 = vadd.f32 %v570, %v392
    %v580 = vmul.f32 %v572, %v572
    %v581 = vmul.f32 %v573, %v573
    %v582 = vmul.f32 %v574, %v574
    %v583 = vmul.f32 %v575, %v575
    %v584 = vmul.f32 %v576, %v576
    %v585 = vmul.f32 %v577, %v577
    %v586 = vmul.f32 %v578, %v578
    %v587 = vmul.f32 %v579, %v579
    %v588 = vadd.f32 %v580, %v582
    %v589 = vadd.f32 %v588, %v584
    %v590 = vadd.f32 %v589, %v586
    %v591 = vrot.slane %v590, 4
    %v592 = vadd.f32 %v590, %v591
    %v593 = vrot.slane %v592, 2
    %v594 = vadd.f32 %v592, %v593
    %v595 = vrot.slane %v594, 1
    %v596 = vadd.f32 %v594, %v595
    %v597 = vadd.f32 %v581, %v583
    %v598 = vadd.f32 %v597, %v585
    %v599 = vadd.f32 %v598, %v587
    %v600 = vrot.slane %v599, 4
    %v601 = vadd.f32 %v599, %v600
    %v602 = vrot.slane %v601, 2
    %v603 = vadd.f32 %v601, %v602
    %v604 = vrot.slane %v603, 1
    %v605 = vadd.f32 %v603, %v604
    %v606 = vmul.f32 %v596, 0.03125
    %v607 = vmul.f32 %v605, 0.03125
    %v608 = vadd.f32 %v606, 1e-12
    %v609 = vadd.f32 %v607, 1e-12
    %v610 = vrsqrt.pop %v608
    %v611 = vrsqrt.pop %v609
    %v612 = vmul.f32 %v572, %v610
    %v613 = vmul.f32 %v573, %v611
    %v614 = vmul.f32 %v574, %v610
    %v615 = vmul.f32 %v575, %v611
    %v616 = vmul.f32 %v576, %v610
    %v617 = vmul.f32 %v577, %v611
    %v618 = vmul.f32 %v578, %v610
    %v619 = vmul.f32 %v579, %v611
    %v620 = vmax.f32 %v612, 0.0
    %v621 = vmax.f32 %v613, 0.0
    %v622 = vmax.f32 %v614, 0.0
    %v623 = vmax.f32 %v615, 0.0
    %v624 = vmax.f32 %v616, 0.0
    %v625 = vmax.f32 %v617, 0.0
    %v626 = vmax.f32 %v618, 0.0
    %v627 = vmax.f32 %v619, 0.0
    %s628 = scalar_lea.vmem %s4, 32
    %v629 = vld [vmem:[%s628] sm:$0xff]
    %v630 = vld [vmem:[%s628 + $0x8] sm:$0xff]
    %v631 = vld [vmem:[%s628 + $0x10] sm:$0xff]
    %v632 = vld [vmem:[%s628 + $0x18] sm:$0xff]
    %s633 = scalar_lea.vmem %s5, 32
    %v634 = vld [vmem:[%s633] sm:$0xff]
    %v635 = vld [vmem:[%s633 + $0x8] sm:$0xff]
    %v636 = vld [vmem:[%s633 + $0x10] sm:$0xff]
    %v637 = vld [vmem:[%s633 + $0x18] sm:$0xff]
    %639 = vset.pattern.permute.xlu0 0
    %640 = vperm.xlu0 %639, %v634
    %v641 = vpop.permute.xlu0 %640
    %644 = vset.pattern.permute.xlu0 0
    %645 = vperm.xlu0 %644, %v635
    %v646 = vpop.permute.xlu0 %645
    %649 = vset.pattern.permute.xlu0 0
    %650 = vperm.xlu0 %649, %v636
    %v651 = vpop.permute.xlu0 %650
    %654 = vset.pattern.permute.xlu0 0
    %655 = vperm.xlu0 %654, %v637
    %v656 = vpop.permute.xlu0 %655
    %v659 = vsel %vm470, %v629, 0
    %v662 = vsel %vm470, %v630, 0
    %v665 = vsel %vm470, %v631, 0
    %v668 = vsel %vm470, %v632, 0
    %670 = vmatprep.subr.mxu0 %v621
    %671 = vmatpush1.msra.mxu0 %v620
    %672 = vmatprep.subr.mxu0 %v623
    %673 = vmatpush1.msra.mxu0 %v622
    %674 = vmatprep.subr.mxu0 %v625
    %675 = vmatpush1.msra.mxu0 %v624
    %676 = vmatprep.subr.mxu0 %v627
    %677 = vmatpush1.msra.mxu0 %v626
    %678 = vmatprep.subr.mxu0 0.0
    %679 = vmatpush1.msra.mxu0 0.0
    %680 = vmatprep.subr.mxu0 0.0
    %681 = vmatpush1.msra.mxu0 0.0
    %682 = vmatprep.subr.mxu0 0.0
    %683 = vmatpush1.msra.mxu0 0.0
    %684 = vmatprep.subr.mxu0 0.0
    %685 = vmatpush1.msra.mxu0 0.0
    %686 = vmatprep.subr.mxu0 0.0
    %687 = vmatpush1.msra.mxu0 0.0
    %688 = vmatprep.subr.mxu0 0.0
    %689 = vmatpush1.msra.mxu0 0.0
    %690 = vmatprep.subr.mxu0 0.0
    %691 = vmatpush1.msra.mxu0 0.0
    %692 = vmatprep.subr.mxu0 0.0
    %693 = vmatpush1.msra.mxu0 0.0
    %694 = vmatprep.subr.mxu0 0.0
    %695 = vmatpush1.msra.mxu0 0.0
    %696 = vmatprep.subr.mxu0 0.0
    %697 = vmatpush1.msra.mxu0 0.0
    %698 = vmatprep.subr.mxu0 0.0
    %699 = vmatpush1.msra.mxu0 0.0
    %700 = vmatprep.subr.mxu0 0.0
    %701 = vmatpush1.msra.mxu0 0.0
    %702 = vmatprep.subr.mxu0 0.0
    %703 = vmatpush1.msra.mxu0 0.0
    %704 = vmatprep.subr.mxu0 0.0
    %705 = vmatpush1.msra.mxu0 0.0
    %706 = vmatprep.subr.mxu0 0.0
    %707 = vmatpush1.msra.mxu0 0.0
    %708 = vmatprep.subr.mxu0 0.0
    %709 = vmatpush1.msra.mxu0 0.0
    %710 = vmatprep.subr.mxu0 0.0
    %711 = vmatpush1.msra.mxu0 0.0
    %712 = vmatprep.subr.mxu0 0.0
    %713 = vmatpush1.msra.mxu0 0.0
    %714 = vmatprep.subr.mxu0 0.0
    %715 = vmatpush1.msra.mxu0 0.0
    %716 = vmatprep.subr.mxu0 0.0
    %717 = vmatpush1.msra.mxu0 0.0
    %718 = vmatprep.subr.mxu0 0.0
    %719 = vmatpush1.msra.mxu0 0.0
    %720 = vmatprep.subr.mxu0 0.0
    %721 = vmatpush1.msra.mxu0 0.0
    %722 = vmatprep.subr.mxu0 0.0
    %723 = vmatpush1.msra.mxu0 0.0
    %724 = vmatprep.subr.mxu0 0.0
    %725 = vmatpush1.msra.mxu0 0.0
    %726 = vmatprep.subr.mxu0 0.0
    %727 = vmatpush1.msra.mxu0 0.0
    %728 = vmatprep.subr.mxu0 0.0
    %729 = vmatpush1.msra.mxu0 0.0
    %730 = vmatprep.subr.mxu0 0.0
    %731 = vmatpush1.msra.mxu0 0.0
    %732 = vmatprep.subr.mxu0 0.0
    %733 = vmatpush1.msra.mxu0 0.0
    %734 = vmatprep.mubr.f32.mxu0 0.0
    %735 = vmatmul.mubr.f32.gmra.mrb[0].mxu0 %v659
    %v736 = vpop.f32.mrb[0].mxu0
    %v737 = vadd.f32 %v641, %v736
    %v738 = vpop.f32.mrb[0].mxu0
    %v739 = vadd.f32 %v641, %v738
    %740 = vmatprep.mubr.f32.mxu0 0.0
    %741 = vmatmul.mubr.f32.gmra.mrb[0].mxu0 %v662
    %v742 = vpop.f32.mrb[0].mxu0
    %v743 = vadd.f32 %v646, %v742
    %v744 = vpop.f32.mrb[0].mxu0
    %v745 = vadd.f32 %v646, %v744
    %746 = vmatprep.mubr.f32.mxu0 0.0
    %747 = vmatmul.mubr.f32.gmra.mrb[0].mxu0 %v665
    %v748 = vpop.f32.mrb[0].mxu0
    %v749 = vadd.f32 %v651, %v748
    %v750 = vpop.f32.mrb[0].mxu0
    %v751 = vadd.f32 %v651, %v750
    %752 = vmatprep.mubr.f32.mxu0 0.0
    %753 = vmatmul.mubr.f32.gmra.mrb[0].mxu0 %v668
    %v754 = vpop.f32.mrb[0].mxu0
    %v755 = vadd.f32 %v656, %v754
    %v756 = vpop.f32.mrb[0].mxu0
    %v757 = vadd.f32 %v656, %v756
    %758 = vdwg.mxu0
    %v759 = vadd.f32 %v737, %v572
    %v760 = vadd.f32 %v739, %v573
    %v761 = vadd.f32 %v743, %v574
    %v762 = vadd.f32 %v745, %v575
    %v763 = vadd.f32 %v749, %v576
    %v764 = vadd.f32 %v751, %v577
    %v765 = vadd.f32 %v755, %v578
    %v766 = vadd.f32 %v757, %v579
    %v767 = vmul.f32 %v759, %v759
    %v768 = vmul.f32 %v760, %v760
    %v769 = vmul.f32 %v761, %v761
    %v770 = vmul.f32 %v762, %v762
    %v771 = vmul.f32 %v763, %v763
    %v772 = vmul.f32 %v764, %v764
    %v773 = vmul.f32 %v765, %v765
    %v774 = vmul.f32 %v766, %v766
    %v775 = vadd.f32 %v767, %v769
    %v776 = vadd.f32 %v775, %v771
    %v777 = vadd.f32 %v776, %v773
    %v778 = vrot.slane %v777, 4
    %v779 = vadd.f32 %v777, %v778
    %v780 = vrot.slane %v779, 2
    %v781 = vadd.f32 %v779, %v780
    %v782 = vrot.slane %v781, 1
    %v783 = vadd.f32 %v781, %v782
    %v784 = vadd.f32 %v768, %v770
    %v785 = vadd.f32 %v784, %v772
    %v786 = vadd.f32 %v785, %v774
    %v787 = vrot.slane %v786, 4
    %v788 = vadd.f32 %v786, %v787
    %v789 = vrot.slane %v788, 2
    %v790 = vadd.f32 %v788, %v789
    %v791 = vrot.slane %v790, 1
    %v792 = vadd.f32 %v790, %v791
    %v793 = vmul.f32 %v783, 0.03125
    %v794 = vmul.f32 %v792, 0.03125
    %v795 = vadd.f32 %v793, 1e-12
    %v796 = vadd.f32 %v794, 1e-12
    %v797 = vrsqrt.pop %v795
    %v798 = vrsqrt.pop %v796
    %v799 = vmul.f32 %v759, %v797
    %v800 = vmul.f32 %v760, %v798
    %v801 = vmul.f32 %v761, %v797
    %v802 = vmul.f32 %v762, %v798
    %v803 = vmul.f32 %v763, %v797
    %v804 = vmul.f32 %v764, %v798
    %v805 = vmul.f32 %v765, %v797
    %v806 = vmul.f32 %v766, %v798
    %v807 = vmax.f32 %v799, 0.0
    %v808 = vmax.f32 %v800, 0.0
    %v809 = vmax.f32 %v801, 0.0
    %v810 = vmax.f32 %v802, 0.0
    %v811 = vmax.f32 %v803, 0.0
    %v812 = vmax.f32 %v804, 0.0
    %v813 = vmax.f32 %v805, 0.0
    %v814 = vmax.f32 %v806, 0.0
    %s815 = scalar_lea.vmem %s4, 64
    %v816 = vld [vmem:[%s815] sm:$0xff]
    %v817 = vld [vmem:[%s815 + $0x8] sm:$0xff]
    %v818 = vld [vmem:[%s815 + $0x10] sm:$0xff]
    %v819 = vld [vmem:[%s815 + $0x18] sm:$0xff]
    %s820 = scalar_lea.vmem %s5, 64
    %v821 = vld [vmem:[%s820] sm:$0xff]
    %v822 = vld [vmem:[%s820 + $0x8] sm:$0xff]
    %v823 = vld [vmem:[%s820 + $0x10] sm:$0xff]
    %v824 = vld [vmem:[%s820 + $0x18] sm:$0xff]
    %826 = vset.pattern.permute.xlu0 0
    %827 = vperm.xlu0 %826, %v821
    %v828 = vpop.permute.xlu0 %827
    %831 = vset.pattern.permute.xlu0 0
    %832 = vperm.xlu0 %831, %v822
    %v833 = vpop.permute.xlu0 %832
    %836 = vset.pattern.permute.xlu0 0
    %837 = vperm.xlu0 %836, %v823
    %v838 = vpop.permute.xlu0 %837
    %841 = vset.pattern.permute.xlu0 0
    %842 = vperm.xlu0 %841, %v824
    %v843 = vpop.permute.xlu0 %842
    %v846 = vsel %vm470, %v816, 0
    %v849 = vsel %vm470, %v817, 0
    %v852 = vsel %vm470, %v818, 0
    %v855 = vsel %vm470, %v819, 0
    %857 = vmatprep.subr.mxu0 %v808
    %858 = vmatpush1.msra.mxu0 %v807
    %859 = vmatprep.subr.mxu0 %v810
    %860 = vmatpush1.msra.mxu0 %v809
    %861 = vmatprep.subr.mxu0 %v812
    %862 = vmatpush1.msra.mxu0 %v811
    %863 = vmatprep.subr.mxu0 %v814
    %864 = vmatpush1.msra.mxu0 %v813
    %865 = vmatprep.subr.mxu0 0.0
    %866 = vmatpush1.msra.mxu0 0.0
    %867 = vmatprep.subr.mxu0 0.0
    %868 = vmatpush1.msra.mxu0 0.0
    %869 = vmatprep.subr.mxu0 0.0
    %870 = vmatpush1.msra.mxu0 0.0
    %871 = vmatprep.subr.mxu0 0.0
    %872 = vmatpush1.msra.mxu0 0.0
    %873 = vmatprep.subr.mxu0 0.0
    %874 = vmatpush1.msra.mxu0 0.0
    %875 = vmatprep.subr.mxu0 0.0
    %876 = vmatpush1.msra.mxu0 0.0
    %877 = vmatprep.subr.mxu0 0.0
    %878 = vmatpush1.msra.mxu0 0.0
    %879 = vmatprep.subr.mxu0 0.0
    %880 = vmatpush1.msra.mxu0 0.0
    %881 = vmatprep.subr.mxu0 0.0
    %882 = vmatpush1.msra.mxu0 0.0
    %883 = vmatprep.subr.mxu0 0.0
    %884 = vmatpush1.msra.mxu0 0.0
    %885 = vmatprep.subr.mxu0 0.0
    %886 = vmatpush1.msra.mxu0 0.0
    %887 = vmatprep.subr.mxu0 0.0
    %888 = vmatpush1.msra.mxu0 0.0
    %889 = vmatprep.subr.mxu0 0.0
    %890 = vmatpush1.msra.mxu0 0.0
    %891 = vmatprep.subr.mxu0 0.0
    %892 = vmatpush1.msra.mxu0 0.0
    %893 = vmatprep.subr.mxu0 0.0
    %894 = vmatpush1.msra.mxu0 0.0
    %895 = vmatprep.subr.mxu0 0.0
    %896 = vmatpush1.msra.mxu0 0.0
    %897 = vmatprep.subr.mxu0 0.0
    %898 = vmatpush1.msra.mxu0 0.0
    %899 = vmatprep.subr.mxu0 0.0
    %900 = vmatpush1.msra.mxu0 0.0
    %901 = vmatprep.subr.mxu0 0.0
    %902 = vmatpush1.msra.mxu0 0.0
    %903 = vmatprep.subr.mxu0 0.0
    %904 = vmatpush1.msra.mxu0 0.0
    %905 = vmatprep.subr.mxu0 0.0
    %906 = vmatpush1.msra.mxu0 0.0
    %907 = vmatprep.subr.mxu0 0.0
    %908 = vmatpush1.msra.mxu0 0.0
    %909 = vmatprep.subr.mxu0 0.0
    %910 = vmatpush1.msra.mxu0 0.0
    %911 = vmatprep.subr.mxu0 0.0
    %912 = vmatpush1.msra.mxu0 0.0
    %913 = vmatprep.subr.mxu0 0.0
    %914 = vmatpush1.msra.mxu0 0.0
    %915 = vmatprep.subr.mxu0 0.0
    %916 = vmatpush1.msra.mxu0 0.0
    %917 = vmatprep.subr.mxu0 0.0
    %918 = vmatpush1.msra.mxu0 0.0
    %919 = vmatprep.subr.mxu0 0.0
    %920 = vmatpush1.msra.mxu0 0.0
    %921 = vmatprep.mubr.f32.mxu0 0.0
    %922 = vmatmul.mubr.f32.gmra.mrb[0].mxu0 %v846
    %v923 = vpop.f32.mrb[0].mxu0
    %v924 = vadd.f32 %v828, %v923
    %v925 = vpop.f32.mrb[0].mxu0
    %v926 = vadd.f32 %v828, %v925
    %927 = vmatprep.mubr.f32.mxu0 0.0
    %928 = vmatmul.mubr.f32.gmra.mrb[0].mxu0 %v849
    %v929 = vpop.f32.mrb[0].mxu0
    %v930 = vadd.f32 %v833, %v929
    %v931 = vpop.f32.mrb[0].mxu0
    %v932 = vadd.f32 %v833, %v931
    %933 = vmatprep.mubr.f32.mxu0 0.0
    %934 = vmatmul.mubr.f32.gmra.mrb[0].mxu0 %v852
    %v935 = vpop.f32.mrb[0].mxu0
    %v936 = vadd.f32 %v838, %v935
    %v937 = vpop.f32.mrb[0].mxu0
    %v938 = vadd.f32 %v838, %v937
    %939 = vmatprep.mubr.f32.mxu0 0.0
    %940 = vmatmul.mubr.f32.gmra.mrb[0].mxu0 %v855
    %v941 = vpop.f32.mrb[0].mxu0
    %v942 = vadd.f32 %v843, %v941
    %v943 = vpop.f32.mrb[0].mxu0
    %v944 = vadd.f32 %v843, %v943
    %945 = vdwg.mxu0
    %v946 = vadd.f32 %v924, %v759
    %v947 = vadd.f32 %v926, %v760
    %v948 = vadd.f32 %v930, %v761
    %v949 = vadd.f32 %v932, %v762
    %v950 = vadd.f32 %v936, %v763
    %v951 = vadd.f32 %v938, %v764
    %v952 = vadd.f32 %v942, %v765
    %v953 = vadd.f32 %v944, %v766
    %v954 = vmul.f32 %v946, %v946
    %v955 = vmul.f32 %v947, %v947
    %v956 = vmul.f32 %v948, %v948
    %v957 = vmul.f32 %v949, %v949
    %v958 = vmul.f32 %v950, %v950
    %v959 = vmul.f32 %v951, %v951
    %v960 = vmul.f32 %v952, %v952
    %v961 = vmul.f32 %v953, %v953
    %v962 = vadd.f32 %v954, %v956
    %v963 = vadd.f32 %v962, %v958
    %v964 = vadd.f32 %v963, %v960
    %v965 = vrot.slane %v964, 4
    %v966 = vadd.f32 %v964, %v965
    %v967 = vrot.slane %v966, 2
    %v968 = vadd.f32 %v966, %v967
    %v969 = vrot.slane %v968, 1
    %v970 = vadd.f32 %v968, %v969
    %v971 = vadd.f32 %v955, %v957
    %v972 = vadd.f32 %v971, %v959
    %v973 = vadd.f32 %v972, %v961
    %v974 = vrot.slane %v973, 4
    %v975 = vadd.f32 %v973, %v974
    %v976 = vrot.slane %v975, 2
    %v977 = vadd.f32 %v975, %v976
    %v978 = vrot.slane %v977, 1
    %v979 = vadd.f32 %v977, %v978
    %v980 = vmul.f32 %v970, 0.03125
    %v981 = vmul.f32 %v979, 0.03125
    %v982 = vadd.f32 %v980, 1e-12
    %v983 = vadd.f32 %v981, 1e-12
    %v984 = vrsqrt.pop %v982
    %v985 = vrsqrt.pop %v983
    %v986 = vmul.f32 %v946, %v984
    %v987 = vmul.f32 %v947, %v985
    %v988 = vmul.f32 %v948, %v984
    %v989 = vmul.f32 %v949, %v985
    %v990 = vmul.f32 %v950, %v984
    %v991 = vmul.f32 %v951, %v985
    %v992 = vmul.f32 %v952, %v984
    %v993 = vmul.f32 %v953, %v985
    %v994 = vmax.f32 %v986, 0.0
    %v995 = vmax.f32 %v987, 0.0
    %v996 = vmax.f32 %v988, 0.0
    %v997 = vmax.f32 %v989, 0.0
    %v998 = vmax.f32 %v990, 0.0
    %v999 = vmax.f32 %v991, 0.0
    %v1000 = vmax.f32 %v992, 0.0
    %v1001 = vmax.f32 %v993, 0.0
    %v1002 = vld [vmem:[%s6] sm:$0xff]
    %v1003 = vld [vmem:[%s7] sm:$0xff]
    %1005 = vset.pattern.permute.xlu0 0
    %1006 = vperm.xlu0 %1005, %v1003
    %v1007 = vpop.permute.xlu0 %1006
    %v1010 = vsel %vm470, %v1002, 0
    %1012 = vmatprep.subr.mxu0 %v995
    %1013 = vmatpush1.msra.mxu0 %v994
    %1014 = vmatprep.subr.mxu0 %v997
    %1015 = vmatpush1.msra.mxu0 %v996
    %1016 = vmatprep.subr.mxu0 %v999
    %1017 = vmatpush1.msra.mxu0 %v998
    %1018 = vmatprep.subr.mxu0 %v1001
    %1019 = vmatpush1.msra.mxu0 %v1000
    %1020 = vmatprep.subr.mxu0 0.0
    %1021 = vmatpush1.msra.mxu0 0.0
    %1022 = vmatprep.subr.mxu0 0.0
    %1023 = vmatpush1.msra.mxu0 0.0
    %1024 = vmatprep.subr.mxu0 0.0
    %1025 = vmatpush1.msra.mxu0 0.0
    %1026 = vmatprep.subr.mxu0 0.0
    %1027 = vmatpush1.msra.mxu0 0.0
    %1028 = vmatprep.subr.mxu0 0.0
    %1029 = vmatpush1.msra.mxu0 0.0
    %1030 = vmatprep.subr.mxu0 0.0
    %1031 = vmatpush1.msra.mxu0 0.0
    %1032 = vmatprep.subr.mxu0 0.0
    %1033 = vmatpush1.msra.mxu0 0.0
    %1034 = vmatprep.subr.mxu0 0.0
    %1035 = vmatpush1.msra.mxu0 0.0
    %1036 = vmatprep.subr.mxu0 0.0
    %1037 = vmatpush1.msra.mxu0 0.0
    %1038 = vmatprep.subr.mxu0 0.0
    %1039 = vmatpush1.msra.mxu0 0.0
    %1040 = vmatprep.subr.mxu0 0.0
    %1041 = vmatpush1.msra.mxu0 0.0
    %1042 = vmatprep.subr.mxu0 0.0
    %1043 = vmatpush1.msra.mxu0 0.0
    %1044 = vmatprep.subr.mxu0 0.0
    %1045 = vmatpush1.msra.mxu0 0.0
    %1046 = vmatprep.subr.mxu0 0.0
    %1047 = vmatpush1.msra.mxu0 0.0
    %1048 = vmatprep.subr.mxu0 0.0
    %1049 = vmatpush1.msra.mxu0 0.0
    %1050 = vmatprep.subr.mxu0 0.0
    %1051 = vmatpush1.msra.mxu0 0.0
    %1052 = vmatprep.subr.mxu0 0.0
    %1053 = vmatpush1.msra.mxu0 0.0
    %1054 = vmatprep.subr.mxu0 0.0
    %1055 = vmatpush1.msra.mxu0 0.0
    %1056 = vmatprep.subr.mxu0 0.0
    %1057 = vmatpush1.msra.mxu0 0.0
    %1058 = vmatprep.subr.mxu0 0.0
    %1059 = vmatpush1.msra.mxu0 0.0
    %1060 = vmatprep.subr.mxu0 0.0
    %1061 = vmatpush1.msra.mxu0 0.0
    %1062 = vmatprep.subr.mxu0 0.0
    %1063 = vmatpush1.msra.mxu0 0.0
    %1064 = vmatprep.subr.mxu0 0.0
    %1065 = vmatpush1.msra.mxu0 0.0
    %1066 = vmatprep.subr.mxu0 0.0
    %1067 = vmatpush1.msra.mxu0 0.0
    %1068 = vmatprep.subr.mxu0 0.0
    %1069 = vmatpush1.msra.mxu0 0.0
    %1070 = vmatprep.subr.mxu0 0.0
    %1071 = vmatpush1.msra.mxu0 0.0
    %1072 = vmatprep.subr.mxu0 0.0
    %1073 = vmatpush1.msra.mxu0 0.0
    %1074 = vmatprep.subr.mxu0 0.0
    %1075 = vmatpush1.msra.mxu0 0.0
    %1076 = vmatprep.mubr.f32.mxu0 0.0
    %1077 = vmatmul.mubr.f32.gmra.mrb[0].mxu0 %v1010
    %v1078 = vpop.f32.mrb[0].mxu0
    %v1079 = vadd.f32 %v1007, %v1078
    %v1080 = vpop.f32.mrb[0].mxu0
    %v1081 = vadd.f32 %v1007, %v1080
    %1082 = vdwg.mxu0
    %1083 = vst [vmem:[#allocation2] sm:$0xff] %v1079
    %1084 = vst [vmem:[#allocation2 + $0x8] sm:$0xff] %v1081
    // Predicated region
    $region34: #{tpu_custom_call.1} parent=1 // pred_check
      _
    $region35: #{tpu_custom_call.1} parent=1 // pred_check_branch
      %1086 = sbr.rel (0) target = $region37
    $region36: #{tpu_custom_call.1} parent=1 // pred_region
      %s1088 = ssub.s32 256, 256
      %1089 = vsyncadd [#allocation3], %s1088
      %s1091 = sshll.u32 [#allocation2], 4
      %s1092 = int_to_ptr.vmem [resolvable:$true] %s1091
      %1094 = dma.vmem_to_hbm [thread:$0]  %s1092, 256, %s8, [#allocation3]
    $region37: #{tpu_custom_call.1} parent=1 // pred_fallthru
      _
    // Predicated region
    $region38: #{tpu_custom_call.1} parent=1 // pred_check
      _
    $region39: #{tpu_custom_call.1} parent=1 // pred_check_branch
      %1096 = sbr.rel (0) target = $region41
    $region40: #{tpu_custom_call.1} parent=1 // pred_region
      %1097 = dma.done [#allocation3], 256
    $region41: #{tpu_custom_call.1} parent=1 // pred_fallthru
      _
    %1098 = vsyncpa [#allocation3], 1

</llo_original>
